<compile_context>
chip_gen: v5e
topology: v5e:2x2
jax: 0.10.0
libtpu: 0.0.40
codegen_flags: <defaults>
</compile_context>

<pallas_src>
import numpy as np
import jax
import jax.numpy as jnp
from jax.experimental import pallas as pl
from jax.experimental.pallas import tpu as pltpu


def _make_kernel(b_tile, oh, kh, wc):
    """Fused conv (as one banded matmul) + bias + ReLU for `b_tile` images."""

    def kernel(x_ref, w_ref, b_ref, o_ref):
        # x_ref: (b_tile, H, W*C)        compute dtype, lane-dense rows
        # w_ref: (KH*W*C, OW*OCP)        compute dtype, banded weight, grid-resident
        # b_ref: (1, OW*OCP)             f32, grid-resident
        # o_ref: (b_tile, OH, OW*OCP)    f32 (or requested out dtype)
        wv = w_ref[...]                 # hoisted: loaded once per grid step
        bias = b_ref[...]               # (1, OW*OCP) f32

        for n in range(b_tile):         # static unroll; b_tile is small
            # Banded im2col: KH shifted *full* rows concatenated along lanes
            # (each piece is a whole 128-lane row -> aligned, cheap).
            patches = jnp.concatenate(
                [x_ref[n, i:i + oh, :] for i in range(kh)], axis=-1)   # (OH, KH*W*C)
            # Single MXU dot per image, f32 accumulation.
            acc = jnp.dot(patches, wv,
                          preferred_element_type=jnp.float32)          # (OH, OW*OCP)
            # f32 bias + ReLU epilogue, one lane-dense store per image.
            o_ref[n] = jnp.maximum(acc + bias, 0.0).astype(o_ref.dtype)

    return kernel


def make_c3_forward(weight, bias, image_hw, *, compute_dtype=jnp.bfloat16,
                    out_dtype=jnp.float32, b_tile=None):
    """Build a forward fn for Conv2d(C->OC, KHxKW, stride 1, VALID) + ReLU.

    `weight`: (OC, C, KH, KW), `bias`: (OC,), x at call time: (N, C, H, W) NCHW.
    All parameter prep (pad / transpose / banding) happens here, once.
    """
    oc, c, kh, kw = weight.shape
    h, w = image_hw
    oh, ow = h - kh + 1, w - kw + 1
    assert oh >= 1 and ow >= 1
    ocp = ((oc + 127) // 128) * 128         # pad out-channels to full 128 lanes
    wc = w * c                              # lane width of one input row (=128 here)
    k_dim = kh * wc                         # MXU contraction dim (taps folded in)
    lanes_out = ow * ocp                    # lane width of one output row (=512 here)

    # ---- One-time parameter prep (outside the hot path). ----
    # W_band[i*W*C + w*C + ch, c_out*OCP + o] = weight[o, ch, i, w - c_out]
    #   if 0 <= w - c_out < KW else 0   (zeros also cover the OC->OCP pad).
    w_t = jnp.transpose(weight, (2, 3, 1, 0))                       # (KH, KW, C, OC)
    w_t = jnp.pad(w_t, ((0, 0), (0, 0), (0, 0), (0, ocp - oc)))     # (KH, KW, C, OCP)
    ind = np.zeros((kw, w, ow), np.float32)                         # band indicator
    for j in range(kw):
        for co in range(ow):
            ind[j, co + j, co] = 1.0
    w_band = jnp.einsum('ijho,jwc->iwhco',
                        w_t.astype(jnp.float32), jnp.asarray(ind))  # (KH,W,C,OW,OCP)
    w_band = w_band.reshape(k_dim, lanes_out).astype(compute_dtype)
    b_row = jnp.tile(jnp.pad(bias, (0, ocp - oc)), ow)
    b_row = b_row.reshape(1, lanes_out).astype(jnp.float32)

    @jax.jit
    def forward(x_nchw):
        n = x_nchw.shape[0]
        if b_tile is not None:
            bt = b_tile
        else:
            # Largest divisor of N up to 8 images per grid step; per-step work is
            # tiny, so few (often one) grid steps amortize the fixed step overhead.
            bt = n
            for cand in range(min(n, 8), 0, -1):
                if n % cand == 0:
                    bt = cand
                    break
        assert n % bt == 0, "batch must be divisible by b_tile"

        # Lane-dense rows: (N, C, H, W) -> (N, H, W*C).  (If the surrounding model
        # stayed NHWC / 128-channel-padded, this transpose and the final one could
        # be removed entirely.)
        x_rows = jnp.transpose(x_nchw, (0, 2, 3, 1)).reshape(n, h, wc)
        x_rows = x_rows.astype(compute_dtype)

        kernel = _make_kernel(bt, oh, kh, wc)
        flops = 2 * n * oh * k_dim * lanes_out          # includes banded zeros
        bytes_accessed = (x_rows.size * x_rows.dtype.itemsize
                          + w_band.size * w_band.dtype.itemsize
                          + b_row.size * 4
                          + n * oh * lanes_out * jnp.dtype(out_dtype).itemsize)

        out = pl.pallas_call(
            kernel,
            out_shape=jax.ShapeDtypeStruct((n, oh, lanes_out), out_dtype),
            grid_spec=pltpu.PrefetchScalarGridSpec(
                num_scalar_prefetch=0,
                grid=(n // bt,),                                        # batch steps
                in_specs=[
                    pl.BlockSpec((bt, h, wc), lambda b: (b, 0, 0)),     # streamed x
                    pl.BlockSpec((k_dim, lanes_out), lambda b: (0, 0)),  # resident W
                    pl.BlockSpec((1, lanes_out), lambda b: (0, 0)),      # resident b
                ],
                out_specs=pl.BlockSpec((bt, oh, lanes_out), lambda b: (b, 0, 0)),
            ),
            compiler_params=pltpu.CompilerParams(
                dimension_semantics=("parallel",)),
            cost_estimate=pl.CostEstimate(
                flops=flops, transcendentals=0, bytes_accessed=bytes_accessed),
        )(x_rows, w_band, b_row)

        # (N, OH, OW*OCP) -> (N, OH, OW, OCP) -> drop channel pad -> NCHW.
        out = out.reshape(n, oh, ow, ocp)[..., :oc]
        return jnp.transpose(out, (0, 3, 1, 2))

    return forward


def _reference(x_nchw, weight, bias):
    y = jax.lax.conv_general_dilated(
        x_nchw, weight, window_strides=(1, 1), padding="VALID",
        dimension_numbers=("NCHW", "OIHW", "NCHW"))
    return jnp.maximum(y + bias[None, :, None, None], 0.0)


if __name__ == "__main__":
    key = jax.random.PRNGKey(0)
    k_x, k_w, k_b = jax.random.split(key, 3)

    N, C, H, W = 2, 16, 8, 8          # small input; conv -> (2, 120, 4, 4)
    OC, KH, KW = 120, 5, 5

    x = jax.random.normal(k_x, (N, C, H, W), dtype=jnp.float32)
    # Deterministic PyTorch-style init: U(-bound, bound), bound = 1/sqrt(fan_in)
    fan_in = C * KH * KW
    bound = 1.0 / (fan_in ** 0.5)
    weight = jax.random.uniform(k_w, (OC, C, KH, KW), jnp.float32, -bound, bound)
    bias = jax.random.uniform(k_b, (OC,), jnp.float32, -bound, bound)

    ref = jax.block_until_ready(_reference(x, weight, bias))
    expected_shape = (N, OC, H - KH + 1, W - KW + 1)

    # Exact path: f32 operands, tight check against the XLA conv reference.
    fwd_f32 = make_c3_forward(weight, bias, (H, W), compute_dtype=jnp.float32)
    out_f32 = jax.block_until_ready(fwd_f32(x))
    assert out_f32.shape == expected_shape, out_f32.shape
    assert jnp.allclose(out_f32, ref, atol=1e-4, rtol=1e-4), "f32 mismatch vs reference"

    # Fast path: bf16 operands (MXU-native) with f32 accumulation/epilogue.
    fwd_bf16 = make_c3_forward(weight, bias, (H, W), compute_dtype=jnp.bfloat16)
    out_bf16 = jax.block_until_ready(fwd_bf16(x))
    assert out_bf16.shape == expected_shape, out_bf16.shape
    assert jnp.allclose(out_bf16, ref, atol=5e-2, rtol=5e-2), "bf16 mismatch vs reference"

    print("KERNEL_OK")
</pallas_src>

<mosaic_0001>
module attributes {stable_mosaic.version = 11 : i64} {
  func.func @kernel(%arg0: i32, %arg1: memref<2x8x128xf32, #tpu.memory_space<vmem>>, %arg2: memref<640x512xf32, #tpu.memory_space<vmem>>, %arg3: memref<1x512xf32, #tpu.memory_space<vmem>>, %arg4: memref<2x4x512xf32, #tpu.memory_space<vmem>>) attributes {dimension_semantics = [#tpu.dimension_semantics<parallel>], iteration_bounds = array<i64: 1>, scalar_prefetch = 0 : i64, scratch_operands = 0 : i64, tpu.core_type = #tpu.core_type<tc>, window_params = [{transform_indices = @transform_0, window_bounds = array<i64: 2, 8, 128>}, {pipeline_mode = #tpu.pipeline_mode<synchronous>, transform_indices = @transform_1, window_bounds = array<i64: 640, 512>}, {pipeline_mode = #tpu.pipeline_mode<synchronous>, transform_indices = @transform_2, window_bounds = array<i64: 1, 512>}, {transform_indices = @transform_3, window_bounds = array<i64: 2, 4, 512>}]} {
    %c0 = arith.constant 0 : index
    %c0_0 = arith.constant 0 : index
    %0 = vector.load %arg2[%c0, %c0_0] : memref<640x512xf32, #tpu.memory_space<vmem>>, vector<640x512xf32>
    %c0_1 = arith.constant 0 : index
    %c0_2 = arith.constant 0 : index
    %1 = vector.load %arg3[%c0_1, %c0_2] : memref<1x512xf32, #tpu.memory_space<vmem>>, vector<1x512xf32>
    %c0_3 = arith.constant 0 : index
    %c0_4 = arith.constant 0 : index
    %c0_5 = arith.constant 0 : index
    %2 = vector.load %arg1[%c0_3, %c0_4, %c0_5] : memref<2x8x128xf32, #tpu.memory_space<vmem>>, vector<1x4x128xf32>
    %3 = vector.shape_cast %2 : vector<1x4x128xf32> to vector<4x128xf32>
    %c0_6 = arith.constant 0 : index
    %c1 = arith.constant 1 : index
    %c0_7 = arith.constant 0 : index
    %4 = vector.load %arg1[%c0_6, %c1, %c0_7] : memref<2x8x128xf32, #tpu.memory_space<vmem>>, vector<1x4x128xf32>
    %5 = vector.shape_cast %4 : vector<1x4x128xf32> to vector<4x128xf32>
    %c0_8 = arith.constant 0 : index
    %c2 = arith.constant 2 : index
    %c0_9 = arith.constant 0 : index
    %6 = vector.load %arg1[%c0_8, %c2, %c0_9] : memref<2x8x128xf32, #tpu.memory_space<vmem>>, vector<1x4x128xf32>
    %7 = vector.shape_cast %6 : vector<1x4x128xf32> to vector<4x128xf32>
    %c0_10 = arith.constant 0 : index
    %c3 = arith.constant 3 : index
    %c0_11 = arith.constant 0 : index
    %8 = vector.load %arg1[%c0_10, %c3, %c0_11] : memref<2x8x128xf32, #tpu.memory_space<vmem>>, vector<1x4x128xf32>
    %9 = vector.shape_cast %8 : vector<1x4x128xf32> to vector<4x128xf32>
    %c0_12 = arith.constant 0 : index
    %c4 = arith.constant 4 : index
    %c0_13 = arith.constant 0 : index
    %10 = vector.load %arg1[%c0_12, %c4, %c0_13] : memref<2x8x128xf32, #tpu.memory_space<vmem>>, vector<1x4x128xf32>
    %11 = vector.shape_cast %10 : vector<1x4x128xf32> to vector<4x128xf32>
    %12 = tpu.concatenate %3, %5, %7, %9, %11 in 1 : vector<4x128xf32>, vector<4x128xf32>, vector<4x128xf32>, vector<4x128xf32>, vector<4x128xf32> -> vector<4x640xf32>
    %cst = arith.constant dense<0.000000e+00> : vector<4x512xf32>
    %13 = tpu.matmul %12, %0, %cst {dimension_numbers = #tpu.dot_dimension_numbers<[1], [0], [0], [1], [0, 0, 1, 1], [], []>} : vector<4x640xf32>, vector<640x512xf32>, vector<4x512xf32> -> vector<4x512xf32>
    %14 = vector.broadcast %1 : vector<1x512xf32> to vector<4x512xf32>
    %15 = arith.addf %13, %14 : vector<4x512xf32>
    %cst_14 = arith.constant 0.000000e+00 : f32
    %16 = vector.broadcast %cst_14 : f32 to vector<4x512xf32>
    %17 = arith.maximumf %15, %16 : vector<4x512xf32>
    %c0_15 = arith.constant 0 : index
    %c0_16 = arith.constant 0 : index
    %c0_17 = arith.constant 0 : index
    %18 = vector.load %arg4[%c0_15, %c0_16, %c0_17] : memref<2x4x512xf32, #tpu.memory_space<vmem>>, vector<1x4x512xf32>
    %19 = vector.shape_cast %18 : vector<1x4x512xf32> to vector<4x512xf32>
    %20 = vector.shape_cast %17 : vector<4x512xf32> to vector<1x4x512xf32>
    tpu.vector_store %arg4[%c0_15, %c0_16, %c0_17], %20 {strides = array<i32>} : memref<2x4x512xf32, #tpu.memory_space<vmem>>, vector<1x4x512xf32>,
    %c1_18 = arith.constant 1 : index
    %c0_19 = arith.constant 0 : index
    %c0_20 = arith.constant 0 : index
    %21 = vector.load %arg1[%c1_18, %c0_19, %c0_20] : memref<2x8x128xf32, #tpu.memory_space<vmem>>, vector<1x4x128xf32>
    %22 = vector.shape_cast %21 : vector<1x4x128xf32> to vector<4x128xf32>
    %c1_21 = arith.constant 1 : index
    %c1_22 = arith.constant 1 : index
    %c0_23 = arith.constant 0 : index
    %23 = vector.load %arg1[%c1_21, %c1_22, %c0_23] : memref<2x8x128xf32, #tpu.memory_space<vmem>>, vector<1x4x128xf32>
    %24 = vector.shape_cast %23 : vector<1x4x128xf32> to vector<4x128xf32>
    %c1_24 = arith.constant 1 : index
    %c2_25 = arith.constant 2 : index
    %c0_26 = arith.constant 0 : index
    %25 = vector.load %arg1[%c1_24, %c2_25, %c0_26] : memref<2x8x128xf32, #tpu.memory_space<vmem>>, vector<1x4x128xf32>
    %26 = vector.shape_cast %25 : vector<1x4x128xf32> to vector<4x128xf32>
    %c1_27 = arith.constant 1 : index
    %c3_28 = arith.constant 3 : index
    %c0_29 = arith.constant 0 : index
    %27 = vector.load %arg1[%c1_27, %c3_28, %c0_29] : memref<2x8x128xf32, #tpu.memory_space<vmem>>, vector<1x4x128xf32>
    %28 = vector.shape_cast %27 : vector<1x4x128xf32> to vector<4x128xf32>
    %c1_30 = arith.constant 1 : index
    %c4_31 = arith.constant 4 : index
    %c0_32 = arith.constant 0 : index
    %29 = vector.load %arg1[%c1_30, %c4_31, %c0_32] : memref<2x8x128xf32, #tpu.memory_space<vmem>>, vector<1x4x128xf32>
    %30 = vector.shape_cast %29 : vector<1x4x128xf32> to vector<4x128xf32>
    %31 = tpu.concatenate %22, %24, %26, %28, %30 in 1 : vector<4x128xf32>, vector<4x128xf32>, vector<4x128xf32>, vector<4x128xf32>, vector<4x128xf32> -> vector<4x640xf32>
    %cst_33 = arith.constant dense<0.000000e+00> : vector<4x512xf32>
    %32 = tpu.matmul %31, %0, %cst_33 {dimension_numbers = #tpu.dot_dimension_numbers<[1], [0], [0], [1], [0, 0, 1, 1], [], []>} : vector<4x640xf32>, vector<640x512xf32>, vector<4x512xf32> -> vector<4x512xf32>
    %33 = vector.broadcast %1 : vector<1x512xf32> to vector<4x512xf32>
    %34 = arith.addf %32, %33 : vector<4x512xf32>
    %cst_34 = arith.constant 0.000000e+00 : f32
    %35 = vector.broadcast %cst_34 : f32 to vector<4x512xf32>
    %36 = arith.maximumf %34, %35 : vector<4x512xf32>
    %c1_35 = arith.constant 1 : index
    %c0_36 = arith.constant 0 : index
    %c0_37 = arith.constant 0 : index
    %37 = vector.load %arg4[%c1_35, %c0_36, %c0_37] : memref<2x4x512xf32, #tpu.memory_space<vmem>>, vector<1x4x512xf32>
    %38 = vector.shape_cast %37 : vector<1x4x512xf32> to vector<4x512xf32>
    %39 = vector.shape_cast %36 : vector<4x512xf32> to vector<1x4x512xf32>
    tpu.vector_store %arg4[%c1_35, %c0_36, %c0_37], %39 {strides = array<i32>} : memref<2x4x512xf32, #tpu.memory_space<vmem>>, vector<1x4x512xf32>,
    return
  }
  func.func @transform_0(%arg0: i32) -> (i32, i32, i32) {
    %c0_i32 = arith.constant 0 : i32
    %c0_i32_0 = arith.constant 0 : i32
    %c0_i32_1 = arith.constant 0 : i32
    return %arg0, %c0_i32, %c0_i32_0 : i32, i32, i32
  }
  func.func @transform_1(%arg0: i32) -> (i32, i32) {
    %c0_i32 = arith.constant 0 : i32
    %c0_i32_0 = arith.constant 0 : i32
    %c0_i32_1 = arith.constant 0 : i32
    return %c0_i32, %c0_i32_0 : i32, i32
  }
  func.func @transform_2(%arg0: i32) -> (i32, i32) {
    %c0_i32 = arith.constant 0 : i32
    %c0_i32_0 = arith.constant 0 : i32
    %c0_i32_1 = arith.constant 0 : i32
    return %c0_i32, %c0_i32_0 : i32, i32
  }
  func.func @transform_3(%arg0: i32) -> (i32, i32, i32) {
    %c0_i32 = arith.constant 0 : i32
    %c0_i32_0 = arith.constant 0 : i32
    %c0_i32_1 = arith.constant 0 : i32
    return %arg0, %c0_i32, %c0_i32_0 : i32, i32, i32
  }
}

</mosaic_0001>

<llo_original>
// kernel: forward.1
$region0: #{forward.1}
  #allocation0 [shape = 'u32[]', space=smem, size = 0x4, offset = 0x4, fixed_abs, tag = 'smem constant byte address 0x4 - core index']
  #allocation1 [shape = 'u32[72,128]{1,0:T(1,128)}', space=vmem, size = 0x9000, scoped, tag = 'internal scratch']
  %s0 = inlined_call_operand.vmem [shape: f32[2,8,128], index: 0, kind: input, shape index: {}]
  %s1 = inlined_call_operand.hbm [shape: f32[640,512], index: 1, kind: input, shape index: {}]
  %s2 = inlined_call_operand.hbm [shape: f32[1,512], index: 2, kind: input, shape index: {}]
  %s3 = inlined_call_operand.vmem [shape: f32[2,4,512], index: 3, kind: output, shape index: {}]
  %s4 = sld [smem:[#allocation0]]
  $region30: #{forward.1} parent=0
    _
  %s6 = ssub.s32 1, %s4
  %s7 = scalar_select 0, %s6, %s4
  $region1: #{forward.1} parent=0
    #allocation2 [shape = 'u8[1310720]{0}', space=vmem, size = 0x140000, scoped, tag = 'input window, operand 1, single buffered']
    #allocation3 [shape = 's32[1]{0}', space=sflag, size = 0x4, scoped, tag = 'scoped memory for forward.1']
    #allocation4 [shape = 'u8[2048]{0}', space=vmem, size = 0x800, scoped, tag = 'input window, operand 2, single buffered']
    #allocation5 [shape = 's32[1]{0}', space=sflag, size = 0x4, scoped, tag = 'scoped memory for forward.1']
    %8 = vsyncpa [#allocation3], 0
    %9 = vsyncpa [#allocation5], 0
    // Predicated region
    $region2: #{forward.1} parent=1 // pred_check
      _
    $region3: #{forward.1} parent=1 // pred_check_branch
      %11 = sbr.rel (0) target = $region5
    $region4: #{forward.1} parent=1 // pred_region
      _
    $region5: #{forward.1} parent=1 // pred_fallthru
      _
    // Predicated region
    $region6: #{forward.1} parent=1 // pred_check
      _
    $region7: #{forward.1} parent=1 // pred_check_branch
      %13 = sbr.rel (0) target = $region9
    $region8: #{forward.1} parent=1 // pred_region
      %15 = vsyncadd [#allocation3], 0
      %s16 = sshll.u32 %s1, 4
      %s17 = int_to_ptr.hbm [resolvable:$true] %s16
      %s18 = sshll.u32 [#allocation2], 4
      %s19 = int_to_ptr.vmem [resolvable:$true] %s18
      %24 = dma.hbm_to_vmem [thread:$0]  %s17, 40960, %s19, [#allocation3], 512, 512, 32
    $region9: #{forward.1} parent=1 // pred_fallthru
      _
    // Predicated region
    $region10: #{forward.1} parent=1 // pred_check
      _
    $region11: #{forward.1} parent=1 // pred_check_branch
      %26 = sbr.rel (0) target = $region13
    $region12: #{forward.1} parent=1 // pred_region
      %28 = vsyncadd [#allocation5], 0
      %s30 = sshll.u32 %s2, 4
      %s31 = int_to_ptr.hbm [resolvable:$true] %s30
      %s32 = sshll.u32 [#allocation4], 4
      %s33 = int_to_ptr.vmem [resolvable:$true] %s32
      %35 = dma.hbm_to_vmem [thread:$0]  %s31, 64, %s33, [#allocation5]
    $region13: #{forward.1} parent=1 // pred_fallthru
      _
    // Predicated region
    $region14: #{forward.1} parent=1 // pred_check
      _
    $region15: #{forward.1} parent=1 // pred_check_branch
      %37 = sbr.rel (0) target = $region17
    $region16: #{forward.1} parent=1 // pred_region
      %39 = dma.done [#allocation3], 40960
    $region17: #{forward.1} parent=1 // pred_fallthru
      _
    // Predicated region
    $region18: #{forward.1} parent=1 // pred_check
      _
    $region19: #{forward.1} parent=1 // pred_check_branch
      %41 = sbr.rel (0) target = $region21
    $region20: #{forward.1} parent=1 // pred_region
      %43 = dma.done [#allocation5], 64
    $region21: #{forward.1} parent=1 // pred_fallthru
      _
    %v44 = vld [vmem:[#allocation2] sm:$0xff]
    %v45 = vld [vmem:[#allocation2 + $0x8] sm:$0xff]
    %v46 = vld [vmem:[#allocation2 + $0x10] sm:$0xff]
    %v47 = vld [vmem:[#allocation2 + $0x18] sm:$0xff]
    %v48 = vld [vmem:[#allocation2 + $0x20] sm:$0xff]
    %v49 = vld [vmem:[#allocation2 + $0x28] sm:$0xff]
    %v50 = vld [vmem:[#allocation2 + $0x30] sm:$0xff]
    %v51 = vld [vmem:[#allocation2 + $0x38] sm:$0xff]
    %v52 = vld [vmem:[#allocation2 + $0x40] sm:$0xff]
    %v53 = vld [vmem:[#allocation2 + $0x48] sm:$0xff]
    %v54 = vld [vmem:[#allocation2 + $0x50] sm:$0xff]
    %v55 = vld [vmem:[#allocation2 + $0x58] sm:$0xff]
    %v56 = vld [vmem:[#allocation2 + $0x60] sm:$0xff]
    %v57 = vld [vmem:[#allocation2 + $0x68] sm:$0xff]
    %v58 = vld [vmem:[#allocation2 + $0x70] sm:$0xff]
    %v59 = vld [vmem:[#allocation2 + $0x78] sm:$0xff]
    %v60 = vld [vmem:[#allocation2 + $0x80] sm:$0xff]
    %v61 = vld [vmem:[#allocation2 + $0x88] sm:$0xff]
    %v62 = vld [vmem:[#allocation2 + $0x90] sm:$0xff]
    %v63 = vld [vmem:[#allocation2 + $0x98] sm:$0xff]
    %v64 = vld [vmem:[#allocation2 + $0xa0] sm:$0xff]
    %v65 = vld [vmem:[#allocation2 + $0xa8] sm:$0xff]
    %v66 = vld [vmem:[#allocation2 + $0xb0] sm:$0xff]
    %v67 = vld [vmem:[#allocation2 + $0xb8] sm:$0xff]
    %v68 = vld [vmem:[#allocation2 + $0xc0] sm:$0xff]
    %v69 = vld [vmem:[#allocation2 + $0xc8] sm:$0xff]
    %v70 = vld [vmem:[#allocation2 + $0xd0] sm:$0xff]
    %v71 = vld [vmem:[#allocation2 + $0xd8] sm:$0xff]
    %v72 = vld [vmem:[#allocation2 + $0xe0] sm:$0xff]
    %v73 = vld [vmem:[#allocation2 + $0xe8] sm:$0xff]
    %v74 = vld [vmem:[#allocation2 + $0xf0] sm:$0xff]
    %v75 = vld [vmem:[#allocation2 + $0xf8] sm:$0xff]
    %v76 = vld [vmem:[#allocation2 + $0x100] sm:$0xff]
    %v77 = vld [vmem:[#allocation2 + $0x108] sm:$0xff]
    %v78 = vld [vmem:[#allocation2 + $0x110] sm:$0xff]
    %v79 = vld [vmem:[#allocation2 + $0x118] sm:$0xff]
    %v80 = vld [vmem:[#allocation2 + $0x120] sm:$0xff]
    %v81 = vld [vmem:[#allocation2 + $0x128] sm:$0xff]
    %v82 = vld [vmem:[#allocation2 + $0x130] sm:$0xff]
    %v83 = vld [vmem:[#allocation2 + $0x138] sm:$0xff]
    %v84 = vld [vmem:[#allocation2 + $0x140] sm:$0xff]
    %v85 = vld [vmem:[#allocation2 + $0x148] sm:$0xff]
    %v86 = vld [vmem:[#allocation2 + $0x150] sm:$0xff]
    %v87 = vld [vmem:[#allocation2 + $0x158] sm:$0xff]
    %v88 = vld [vmem:[#allocation2 + $0x160] sm:$0xff]
    %v89 = vld [vmem:[#allocation2 + $0x168] sm:$0xff]
    %v90 = vld [vmem:[#allocation2 + $0x170] sm:$0xff]
    %v91 = vld [vmem:[#allocation2 + $0x178] sm:$0xff]
    %v92 = vld [vmem:[#allocation2 + $0x180] sm:$0xff]
    %v93 = vld [vmem:[#allocation2 + $0x188] sm:$0xff]
    %v94 = vld [vmem:[#allocation2 + $0x190] sm:$0xff]
    %v95 = vld [vmem:[#allocation2 + $0x198] sm:$0xff]
    %v96 = vld [vmem:[#allocation2 + $0x1a0] sm:$0xff]
    %v97 = vld [vmem:[#allocation2 + $0x1a8] sm:$0xff]
    %v98 = vld [vmem:[#allocation2 + $0x1b0] sm:$0xff]
    %v99 = vld [vmem:[#allocation2 + $0x1b8] sm:$0xff]
    %v100 = vld [vmem:[#allocation2 + $0x1c0] sm:$0xff]
    %v101 = vld [vmem:[#allocation2 + $0x1c8] sm:$0xff]
    %v102 = vld [vmem:[#allocation2 + $0x1d0] sm:$0xff]
    %v103 = vld [vmem:[#allocation2 + $0x1d8] sm:$0xff]
    %v104 = vld [vmem:[#allocation2 + $0x1e0] sm:$0xff]
    %v105 = vld [vmem:[#allocation2 + $0x1e8] sm:$0xff]
    %v106 = vld [vmem:[#allocation2 + $0x1f0] sm:$0xff]
    %v107 = vld [vmem:[#allocation2 + $0x1f8] sm:$0xff]
    %v108 = vld [vmem:[#allocation2 + $0x200] sm:$0xff]
    %v109 = vld [vmem:[#allocation2 + $0x208] sm:$0xff]
    %v110 = vld [vmem:[#allocation2 + $0x210] sm:$0xff]
    %v111 = vld [vmem:[#allocation2 + $0x218] sm:$0xff]
    %v112 = vld [vmem:[#allocation2 + $0x220] sm:$0xff]
    %v113 = vld [vmem:[#allocation2 + $0x228] sm:$0xff]
    %v114 = vld [vmem:[#allocation2 + $0x230] sm:$0xff]
    %v115 = vld [vmem:[#allocation2 + $0x238] sm:$0xff]
    %v116 = vld [vmem:[#allocation2 + $0x240] sm:$0xff]
    %v117 = vld [vmem:[#allocation2 + $0x248] sm:$0xff]
    %v118 = vld [vmem:[#allocation2 + $0x250] sm:$0xff]
    %v119 = vld [vmem:[#allocation2 + $0x258] sm:$0xff]
    %v120 = vld [vmem:[#allocation2 + $0x260] sm:$0xff]
    %v121 = vld [vmem:[#allocation2 + $0x268] sm:$0xff]
    %v122 = vld [vmem:[#allocation2 + $0x270] sm:$0xff]
    %v123 = vld [vmem:[#allocation2 + $0x278] sm:$0xff]
    %v124 = vld [vmem:[#allocation2 + $0x280] sm:$0xff]
    %v125 = vld [vmem:[#allocation2 + $0x288] sm:$0xff]
    %v126 = vld [vmem:[#allocation2 + $0x290] sm:$0xff]
    %v127 = vld [vmem:[#allocation2 + $0x298] sm:$0xff]
    %v128 = vld [vmem:[#allocation2 + $0x2a0] sm:$0xff]
    %v129 = vld [vmem:[#allocation2 + $0x2a8] sm:$0xff]
    %v130 = vld [vmem:[#allocation2 + $0x2b0] sm:$0xff]
    %v131 = vld [vmem:[#allocation2 + $0x2b8] sm:$0xff]
    %v132 = vld [vmem:[#allocation2 + $0x2c0] sm:$0xff]
    %v133 = vld [vmem:[#allocation2 + $0x2c8] sm:$0xff]
    %v134 = vld [vmem:[#allocation2 + $0x2d0] sm:$0xff]
    %v135 = vld [vmem:[#allocation2 + $0x2d8] sm:$0xff]
    %v136 = vld [vmem:[#allocation2 + $0x2e0] sm:$0xff]
    %v137 = vld [vmem:[#allocation2 + $0x2e8] sm:$0xff]
    %v138 = vld [vmem:[#allocation2 + $0x2f0] sm:$0xff]
    %v139 = vld [vmem:[#allocation2 + $0x2f8] sm:$0xff]
    %v140 = vld [vmem:[#allocation2 + $0x300] sm:$0xff]
    %v141 = vld [vmem:[#allocation2 + $0x308] sm:$0xff]
    %v142 = vld [vmem:[#allocation2 + $0x310] sm:$0xff]
    %v143 = vld [vmem:[#allocation2 + $0x318] sm:$0xff]
    %v144 = vld [vmem:[#allocation2 + $0x320] sm:$0xff]
    %v145 = vld [vmem:[#allocation2 + $0x328] sm:$0xff]
    %v146 = vld [vmem:[#allocation2 + $0x330] sm:$0xff]
    %v147 = vld [vmem:[#allocation2 + $0x338] sm:$0xff]
    %v148 = vld [vmem:[#allocation2 + $0x340] sm:$0xff]
    %v149 = vld [vmem:[#allocation2 + $0x348] sm:$0xff]
    %v150 = vld [vmem:[#allocation2 + $0x350] sm:$0xff]
    %v151 = vld [vmem:[#allocation2 + $0x358] sm:$0xff]
    %v152 = vld [vmem:[#allocation2 + $0x360] sm:$0xff]
    %v153 = vld [vmem:[#allocation2 + $0x368] sm:$0xff]
    %v154 = vld [vmem:[#allocation2 + $0x370] sm:$0xff]
    %v155 = vld [vmem:[#allocation2 + $0x378] sm:$0xff]
    %v156 = vld [vmem:[#allocation2 + $0x380] sm:$0xff]
    %v157 = vld [vmem:[#allocation2 + $0x388] sm:$0xff]
    %v158 = vld [vmem:[#allocation2 + $0x390] sm:$0xff]
    %v159 = vld [vmem:[#allocation2 + $0x398] sm:$0xff]
    %v160 = vld [vmem:[#allocation2 + $0x3a0] sm:$0xff]
    %v161 = vld [vmem:[#allocation2 + $0x3a8] sm:$0xff]
    %v162 = vld [vmem:[#allocation2 + $0x3b0] sm:$0xff]
    %v163 = vld [vmem:[#allocation2 + $0x3b8] sm:$0xff]
    %v164 = vld [vmem:[#allocation2 + $0x3c0] sm:$0xff]
    %v165 = vld [vmem:[#allocation2 + $0x3c8] sm:$0xff]
    %v166 = vld [vmem:[#allocation2 + $0x3d0] sm:$0xff]
    %v167 = vld [vmem:[#allocation2 + $0x3d8] sm:$0xff]
    %v168 = vld [vmem:[#allocation2 + $0x3e0] sm:$0xff]
    %v169 = vld [vmem:[#allocation2 + $0x3e8] sm:$0xff]
    %v170 = vld [vmem:[#allocation2 + $0x3f0] sm:$0xff]
    %v171 = vld [vmem:[#allocation2 + $0x3f8] sm:$0xff]
    %v172 = vld [vmem:[#allocation2 + $0x400] sm:$0xff]
    %v173 = vld [vmem:[#allocation2 + $0x408] sm:$0xff]
    %v174 = vld [vmem:[#allocation2 + $0x410] sm:$0xff]
    %v175 = vld [vmem:[#allocation2 + $0x418] sm:$0xff]
    %v176 = vld [vmem:[#allocation2 + $0x420] sm:$0xff]
    %v177 = vld [vmem:[#allocation2 + $0x428] sm:$0xff]
    %v178 = vld [vmem:[#allocation2 + $0x430] sm:$0xff]
    %v179 = vld [vmem:[#allocation2 + $0x438] sm:$0xff]
    %v180 = vld [vmem:[#allocation2 + $0x440] sm:$0xff]
    %v181 = vld [vmem:[#allocation2 + $0x448] sm:$0xff]
    %v182 = vld [vmem:[#allocation2 + $0x450] sm:$0xff]
    %v183 = vld [vmem:[#allocation2 + $0x458] sm:$0xff]
    %v184 = vld [vmem:[#allocation2 + $0x460] sm:$0xff]
    %v185 = vld [vmem:[#allocation2 + $0x468] sm:$0xff]
    %v186 = vld [vmem:[#allocation2 + $0x470] sm:$0xff]
    %v187 = vld [vmem:[#allocation2 + $0x478] sm:$0xff]
    %v188 = vld [vmem:[#allocation2 + $0x480] sm:$0xff]
    %v189 = vld [vmem:[#allocation2 + $0x488] sm:$0xff]
    %v190 = vld [vmem:[#allocation2 + $0x490] sm:$0xff]
    %v191 = vld [vmem:[#allocation2 + $0x498] sm:$0xff]
    %v192 = vld [vmem:[#allocation2 + $0x4a0] sm:$0xff]
    %v193 = vld [vmem:[#allocation2 + $0x4a8] sm:$0xff]
    %v194 = vld [vmem:[#allocation2 + $0x4b0] sm:$0xff]
    %v195 = vld [vmem:[#allocation2 + $0x4b8] sm:$0xff]
    %v196 = vld [vmem:[#allocation2 + $0x4c0] sm:$0xff]
    %v197 = vld [vmem:[#allocation2 + $0x4c8] sm:$0xff]
    %v198 = vld [vmem:[#allocation2 + $0x4d0] sm:$0xff]
    %v199 = vld [vmem:[#allocation2 + $0x4d8] sm:$0xff]
    %v200 = vld [vmem:[#allocation2 + $0x4e0] sm:$0xff]
    %v201 = vld [vmem:[#allocation2 + $0x4e8] sm:$0xff]
    %v202 = vld [vmem:[#allocation2 + $0x4f0] sm:$0xff]
    %v203 = vld [vmem:[#allocation2 + $0x4f8] sm:$0xff]
    %v204 = vld [vmem:[#allocation2 + $0x500] sm:$0xff]
    %v205 = vld [vmem:[#allocation2 + $0x508] sm:$0xff]
    %v206 = vld [vmem:[#allocation2 + $0x510] sm:$0xff]
    %v207 = vld [vmem:[#allocation2 + $0x518] sm:$0xff]
    %v208 = vld [vmem:[#allocation2 + $0x520] sm:$0xff]
    %v209 = vld [vmem:[#allocation2 + $0x528] sm:$0xff]
    %v210 = vld [vmem:[#allocation2 + $0x530] sm:$0xff]
    %v211 = vld [vmem:[#allocation2 + $0x538] sm:$0xff]
    %v212 = vld [vmem:[#allocation2 + $0x540] sm:$0xff]
    %v213 = vld [vmem:[#allocation2 + $0x548] sm:$0xff]
    %v214 = vld [vmem:[#allocation2 + $0x550] sm:$0xff]
    %v215 = vld [vmem:[#allocation2 + $0x558] sm:$0xff]
    %v216 = vld [vmem:[#allocation2 + $0x560] sm:$0xff]
    %v217 = vld [vmem:[#allocation2 + $0x568] sm:$0xff]
    %v218 = vld [vmem:[#allocation2 + $0x570] sm:$0xff]
    %v219 = vld [vmem:[#allocation2 + $0x578] sm:$0xff]
    %v220 = vld [vmem:[#allocation2 + $0x580] sm:$0xff]
    %v221 = vld [vmem:[#allocation2 + $0x588] sm:$0xff]
    %v222 = vld [vmem:[#allocation2 + $0x590] sm:$0xff]
    %v223 = vld [vmem:[#allocation2 + $0x598] sm:$0xff]
    %v224 = vld [vmem:[#allocation2 + $0x5a0] sm:$0xff]
    %v225 = vld [vmem:[#allocation2 + $0x5a8] sm:$0xff]
    %v226 = vld [vmem:[#allocation2 + $0x5b0] sm:$0xff]
    %v227 = vld [vmem:[#allocation2 + $0x5b8] sm:$0xff]
    %v228 = vld [vmem:[#allocation2 + $0x5c0] sm:$0xff]
    %v229 = vld [vmem:[#allocation2 + $0x5c8] sm:$0xff]
    %v230 = vld [vmem:[#allocation2 + $0x5d0] sm:$0xff]
    %v231 = vld [vmem:[#allocation2 + $0x5d8] sm:$0xff]
    %v232 = vld [vmem:[#allocation2 + $0x5e0] sm:$0xff]
    %v233 = vld [vmem:[#allocation2 + $0x5e8] sm:$0xff]
    %v234 = vld [vmem:[#allocation2 + $0x5f0] sm:$0xff]
    %v235 = vld [vmem:[#allocation2 + $0x5f8] sm:$0xff]
    %v236 = vld [vmem:[#allocation2 + $0x600] sm:$0xff]
    %v237 = vld [vmem:[#allocation2 + $0x608] sm:$0xff]
    %v238 = vld [vmem:[#allocation2 + $0x610] sm:$0xff]
    %v239 = vld [vmem:[#allocation2 + $0x618] sm:$0xff]
    %v240 = vld [vmem:[#allocation2 + $0x620] sm:$0xff]
    %v241 = vld [vmem:[#allocation2 + $0x628] sm:$0xff]
    %v242 = vld [vmem:[#allocation2 + $0x630] sm:$0xff]
    %v243 = vld [vmem:[#allocation2 + $0x638] sm:$0xff]
    %v244 = vld [vmem:[#allocation2 + $0x640] sm:$0xff]
    %v245 = vld [vmem:[#allocation2 + $0x648] sm:$0xff]
    %v246 = vld [vmem:[#allocation2 + $0x650] sm:$0xff]
    %v247 = vld [vmem:[#allocation2 + $0x658] sm:$0xff]
    %v248 = vld [vmem:[#allocation2 + $0x660] sm:$0xff]
    %v249 = vld [vmem:[#allocation2 + $0x668] sm:$0xff]
    %v250 = vld [vmem:[#allocation2 + $0x670] sm:$0xff]
    %v251 = vld [vmem:[#allocation2 + $0x678] sm:$0xff]
    %v252 = vld [vmem:[#allocation2 + $0x680] sm:$0xff]
    %v253 = vld [vmem:[#allocation2 + $0x688] sm:$0xff]
    %v254 = vld [vmem:[#allocation2 + $0x690] sm:$0xff]
    %v255 = vld [vmem:[#allocation2 + $0x698] sm:$0xff]
    %v256 = vld [vmem:[#allocation2 + $0x6a0] sm:$0xff]
    %v257 = vld [vmem:[#allocation2 + $0x6a8] sm:$0xff]
    %v258 = vld [vmem:[#allocation2 + $0x6b0] sm:$0xff]
    %v259 = vld [vmem:[#allocation2 + $0x6b8] sm:$0xff]
    %v260 = vld [vmem:[#allocation2 + $0x6c0] sm:$0xff]
    %v261 = vld [vmem:[#allocation2 + $0x6c8] sm:$0xff]
    %v262 = vld [vmem:[#allocation2 + $0x6d0] sm:$0xff]
    %v263 = vld [vmem:[#allocation2 + $0x6d8] sm:$0xff]
    %v264 = vld [vmem:[#allocation2 + $0x6e0] sm:$0xff]
    %v265 = vld [vmem:[#allocation2 + $0x6e8] sm:$0xff]
    %v266 = vld [vmem:[#allocation2 + $0x6f0] sm:$0xff]
    %v267 = vld [vmem:[#allocation2 + $0x6f8] sm:$0xff]
    %v268 = vld [vmem:[#allocation2 + $0x700] sm:$0xff]
    %v269 = vld [vmem:[#allocation2 + $0x708] sm:$0xff]
    %v270 = vld [vmem:[#allocation2 + $0x710] sm:$0xff]
    %v271 = vld [vmem:[#allocation2 + $0x718] sm:$0xff]
    %v272 = vld [vmem:[#allocation2 + $0x720] sm:$0xff]
    %v273 = vld [vmem:[#allocation2 + $0x728] sm:$0xff]
    %v274 = vld [vmem:[#allocation2 + $0x730] sm:$0xff]
    %v275 = vld [vmem:[#allocation2 + $0x738] sm:$0xff]
    %v276 = vld [vmem:[#allocation2 + $0x740] sm:$0xff]
    %v277 = vld [vmem:[#allocation2 + $0x748] sm:$0xff]
    %v278 = vld [vmem:[#allocation2 + $0x750] sm:$0xff]
    %v279 = vld [vmem:[#allocation2 + $0x758] sm:$0xff]
    %v280 = vld [vmem:[#allocation2 + $0x760] sm:$0xff]
    %v281 = vld [vmem:[#allocation2 + $0x768] sm:$0xff]
    %v282 = vld [vmem:[#allocation2 + $0x770] sm:$0xff]
    %v283 = vld [vmem:[#allocation2 + $0x778] sm:$0xff]
    %v284 = vld [vmem:[#allocation2 + $0x780] sm:$0xff]
    %v285 = vld [vmem:[#allocation2 + $0x788] sm:$0xff]
    %v286 = vld [vmem:[#allocation2 + $0x790] sm:$0xff]
    %v287 = vld [vmem:[#allocation2 + $0x798] sm:$0xff]
    %v288 = vld [vmem:[#allocation2 + $0x7a0] sm:$0xff]
    %v289 = vld [vmem:[#allocation2 + $0x7a8] sm:$0xff]
    %v290 = vld [vmem:[#allocation2 + $0x7b0] sm:$0xff]
    %v291 = vld [vmem:[#allocation2 + $0x7b8] sm:$0xff]
    %v292 = vld [vmem:[#allocation2 + $0x7c0] sm:$0xff]
    %v293 = vld [vmem:[#allocation2 + $0x7c8] sm:$0xff]
    %v294 = vld [vmem:[#allocation2 + $0x7d0] sm:$0xff]
    %v295 = vld [vmem:[#allocation2 + $0x7d8] sm:$0xff]
    %v296 = vld [vmem:[#allocation2 + $0x7e0] sm:$0xff]
    %v297 = vld [vmem:[#allocation2 + $0x7e8] sm:$0xff]
    %v298 = vld [vmem:[#allocation2 + $0x7f0] sm:$0xff]
    %v299 = vld [vmem:[#allocation2 + $0x7f8] sm:$0xff]
    %v300 = vld [vmem:[#allocation2 + $0x800] sm:$0xff]
    %v301 = vld [vmem:[#allocation2 + $0x808] sm:$0xff]
    %v302 = vld [vmem:[#allocation2 + $0x810] sm:$0xff]
    %v303 = vld [vmem:[#allocation2 + $0x818] sm:$0xff]
    %v304 = vld [vmem:[#allocation2 + $0x820] sm:$0xff]
    %v305 = vld [vmem:[#allocation2 + $0x828] sm:$0xff]
    %v306 = vld [vmem:[#allocation2 + $0x830] sm:$0xff]
    %v307 = vld [vmem:[#allocation2 + $0x838] sm:$0xff]
    %v308 = vld [vmem:[#allocation2 + $0x840] sm:$0xff]
    %v309 = vld [vmem:[#allocation2 + $0x848] sm:$0xff]
    %v310 = vld [vmem:[#allocation2 + $0x850] sm:$0xff]
    %v311 = vld [vmem:[#allocation2 + $0x858] sm:$0xff]
    %v312 = vld [vmem:[#allocation2 + $0x860] sm:$0xff]
    %v313 = vld [vmem:[#allocation2 + $0x868] sm:$0xff]
    %v314 = vld [vmem:[#allocation2 + $0x870] sm:$0xff]
    %v315 = vld [vmem:[#allocation2 + $0x878] sm:$0xff]
    %v316 = vld [vmem:[#allocation2 + $0x880] sm:$0xff]
    %v317 = vld [vmem:[#allocation2 + $0x888] sm:$0xff]
    %v318 = vld [vmem:[#allocation2 + $0x890] sm:$0xff]
    %v319 = vld [vmem:[#allocation2 + $0x898] sm:$0xff]
    %v320 = vld [vmem:[#allocation2 + $0x8a0] sm:$0xff]
    %v321 = vld [vmem:[#allocation2 + $0x8a8] sm:$0xff]
    %v322 = vld [vmem:[#allocation2 + $0x8b0] sm:$0xff]
    %v323 = vld [vmem:[#allocation2 + $0x8b8] sm:$0xff]
    %v324 = vld [vmem:[#allocation2 + $0x8c0] sm:$0xff]
    %v325 = vld [vmem:[#allocation2 + $0x8c8] sm:$0xff]
    %v326 = vld [vmem:[#allocation2 + $0x8d0] sm:$0xff]
    %v327 = vld [vmem:[#allocation2 + $0x8d8] sm:$0xff]
    %v328 = vld [vmem:[#allocation2 + $0x8e0] sm:$0xff]
    %v329 = vld [vmem:[#allocation2 + $0x8e8] sm:$0xff]
    %v330 = vld [vmem:[#allocation2 + $0x8f0] sm:$0xff]
    %v331 = vld [vmem:[#allocation2 + $0x8f8] sm:$0xff]
    %v332 = vld [vmem:[#allocation2 + $0x900] sm:$0xff]
    %v333 = vld [vmem:[#allocation2 + $0x908] sm:$0xff]
    %v334 = vld [vmem:[#allocation2 + $0x910] sm:$0xff]
    %v335 = vld [vmem:[#allocation2 + $0x918] sm:$0xff]
    %v336 = vld [vmem:[#allocation2 + $0x920] sm:$0xff]
    %v337 = vld [vmem:[#allocation2 + $0x928] sm:$0xff]
    %v338 = vld [vmem:[#allocation2 + $0x930] sm:$0xff]
    %v339 = vld [vmem:[#allocation2 + $0x938] sm:$0xff]
    %v340 = vld [vmem:[#allocation2 + $0x940] sm:$0xff]
    %v341 = vld [vmem:[#allocation2 + $0x948] sm:$0xff]
    %v342 = vld [vmem:[#allocation2 + $0x950] sm:$0xff]
    %v343 = vld [vmem:[#allocation2 + $0x958] sm:$0xff]
    %v344 = vld [vmem:[#allocation2 + $0x960] sm:$0xff]
    %v345 = vld [vmem:[#allocation2 + $0x968] sm:$0xff]
    %v346 = vld [vmem:[#allocation2 + $0x970] sm:$0xff]
    %v347 = vld [vmem:[#allocation2 + $0x978] sm:$0xff]
    %v348 = vld [vmem:[#allocation2 + $0x980] sm:$0xff]
    %v349 = vld [vmem:[#allocation2 + $0x988] sm:$0xff]
    %v350 = vld [vmem:[#allocation2 + $0x990] sm:$0xff]
    %v351 = vld [vmem:[#allocation2 + $0x998] sm:$0xff]
    %v352 = vld [vmem:[#allocation2 + $0x9a0] sm:$0xff]
    %v353 = vld [vmem:[#allocation2 + $0x9a8] sm:$0xff]
    %v354 = vld [vmem:[#allocation2 + $0x9b0] sm:$0xff]
    %v355 = vld [vmem:[#allocation2 + $0x9b8] sm:$0xff]
    %v356 = vld [vmem:[#allocation2 + $0x9c0] sm:$0xff]
    %v357 = vld [vmem:[#allocation2 + $0x9c8] sm:$0xff]
    %v358 = vld [vmem:[#allocation2 + $0x9d0] sm:$0xff]
    %v359 = vld [vmem:[#allocation2 + $0x9d8] sm:$0xff]
    %v360 = vld [vmem:[#allocation2 + $0x9e0] sm:$0xff]
    %v361 = vld [vmem:[#allocation2 + $0x9e8] sm:$0xff]
    %v362 = vld [vmem:[#allocation2 + $0x9f0] sm:$0xff]
    %v363 = vld [vmem:[#allocation2 + $0x9f8] sm:$0xff]
    %v364 = vld [vmem:[#allocation4] sm:$0xf]
    %v365 = vld [vmem:[%s0] sm:$0xf]
    %v366 = vld [vmem:[%s0 + $0x1] sm:$0xf]
    %v367 = vld [vmem:[%s0 + $0x2] sm:$0xf]
    %v368 = vld [vmem:[%s0 + $0x3] sm:$0xf]
    %v369 = vld [vmem:[%s0 + $0x4] sm:$0xf]
    %v371 = vperm.slane %v364, 0
    %v372 = vperm.slane %v364, 1
    %v373 = vperm.slane %v364, 2
    %v374 = vperm.slane %v364, 3
    %379 = vmatpush.msra.mxu0 %v104
    %380 = vmatpush.msra.mxu0 %v100
    %381 = vmatpush.msra.mxu0 %v96
    %382 = vmatpush.msra.mxu0 %v92
    %383 = vmatpush.msra.mxu0 %v88
    %384 = vmatpush.msra.mxu0 %v84
    %385 = vmatpush.msra.mxu0 %v80
    %386 = vmatpush.msra.mxu0 %v76
    %387 = vmatpush.msra.mxu0 %v72
    %388 = vmatpush.msra.mxu0 %v68
    %389 = vmatpush.msra.mxu0 %v64
    %390 = vmatpush.msra.mxu0 %v60
    %391 = vmatpush.msra.mxu0 %v56
    %392 = vmatpush.msra.mxu0 %v52
    %393 = vmatpush.msra.mxu0 %v48
    %394 = vmatpush.msra.mxu0 %v44
    %395 = vmatmul.f32.gmra.mxu0 %v365
    %v396 = vpop.f32.mrf.mxu0
    %v397 = vadd.f32 %v371, %v396
    %398 = vdwg.mxu0
    %399 = vmatpush.msra.mxu0 %v168
    %400 = vmatpush.msra.mxu0 %v164
    %401 = vmatpush.msra.mxu0 %v160
    %402 = vmatpush.msra.mxu0 %v156
    %403 = vmatpush.msra.mxu0 %v152
    %404 = vmatpush.msra.mxu0 %v148
    %405 = vmatpush.msra.mxu0 %v144
    %406 = vmatpush.msra.mxu0 %v140
    %407 = vmatpush.msra.mxu0 %v136
    %408 = vmatpush.msra.mxu0 %v132
    %409 = vmatpush.msra.mxu0 %v128
    %410 = vmatpush.msra.mxu0 %v124
    %411 = vmatpush.msra.mxu0 %v120
    %412 = vmatpush.msra.mxu0 %v116
    %413 = vmatpush.msra.mxu0 %v112
    %414 = vmatpush.msra.mxu0 %v108
    %415 = vmatmul.f32.gmra.mxu0 %v366
    %v416 = vpop.f32.mrf.mxu0
    %v417 = vadd.f32 %v397, %v416
    %418 = vdwg.mxu0
    %419 = vmatpush.msra.mxu0 %v232
    %420 = vmatpush.msra.mxu0 %v228
    %421 = vmatpush.msra.mxu0 %v224
    %422 = vmatpush.msra.mxu0 %v220
    %423 = vmatpush.msra.mxu0 %v216
    %424 = vmatpush.msra.mxu0 %v212
    %425 = vmatpush.msra.mxu0 %v208
    %426 = vmatpush.msra.mxu0 %v204
    %427 = vmatpush.msra.mxu0 %v200
    %428 = vmatpush.msra.mxu0 %v196
    %429 = vmatpush.msra.mxu0 %v192
    %430 = vmatpush.msra.mxu0 %v188
    %431 = vmatpush.msra.mxu0 %v184
    %432 = vmatpush.msra.mxu0 %v180
    %433 = vmatpush.msra.mxu0 %v176
    %434 = vmatpush.msra.mxu0 %v172
    %435 = vmatmul.f32.gmra.mxu0 %v367
    %v436 = vpop.f32.mrf.mxu0
    %v437 = vadd.f32 %v417, %v436
    %438 = vdwg.mxu0
    %439 = vmatpush.msra.mxu0 %v296
    %440 = vmatpush.msra.mxu0 %v292
    %441 = vmatpush.msra.mxu0 %v288
    %442 = vmatpush.msra.mxu0 %v284
    %443 = vmatpush.msra.mxu0 %v280
    %444 = vmatpush.msra.mxu0 %v276
    %445 = vmatpush.msra.mxu0 %v272
    %446 = vmatpush.msra.mxu0 %v268
    %447 = vmatpush.msra.mxu0 %v264
    %448 = vmatpush.msra.mxu0 %v260
    %449 = vmatpush.msra.mxu0 %v256
    %450 = vmatpush.msra.mxu0 %v252
    %451 = vmatpush.msra.mxu0 %v248
    %452 = vmatpush.msra.mxu0 %v244
    %453 = vmatpush.msra.mxu0 %v240
    %454 = vmatpush.msra.mxu0 %v236
    %455 = vmatmul.f32.gmra.mxu0 %v368
    %v456 = vpop.f32.mrf.mxu0
    %v457 = vadd.f32 %v437, %v456
    %458 = vdwg.mxu0
    %459 = vmatpush.msra.mxu0 %v360
    %460 = vmatpush.msra.mxu0 %v356
    %461 = vmatpush.msra.mxu0 %v352
    %462 = vmatpush.msra.mxu0 %v348
    %463 = vmatpush.msra.mxu0 %v344
    %464 = vmatpush.msra.mxu0 %v340
    %465 = vmatpush.msra.mxu0 %v336
    %466 = vmatpush.msra.mxu0 %v332
    %467 = vmatpush.msra.mxu0 %v328
    %468 = vmatpush.msra.mxu0 %v324
    %469 = vmatpush.msra.mxu0 %v320
    %470 = vmatpush.msra.mxu0 %v316
    %471 = vmatpush.msra.mxu0 %v312
    %472 = vmatpush.msra.mxu0 %v308
    %473 = vmatpush.msra.mxu0 %v304
    %474 = vmatpush.msra.mxu0 %v300
    %475 = vmatmul.f32.gmra.mxu0 %v369
    %v476 = vpop.f32.mrf.mxu0
    %v477 = vadd.f32 %v457, %v476
    %478 = vdwg.mxu0
    %479 = vmatpush.msra.mxu0 %v105
    %480 = vmatpush.msra.mxu0 %v101
    %481 = vmatpush.msra.mxu0 %v97
    %482 = vmatpush.msra.mxu0 %v93
    %483 = vmatpush.msra.mxu0 %v89
    %484 = vmatpush.msra.mxu0 %v85
    %485 = vmatpush.msra.mxu0 %v81
    %486 = vmatpush.msra.mxu0 %v77
    %487 = vmatpush.msra.mxu0 %v73
    %488 = vmatpush.msra.mxu0 %v69
    %489 = vmatpush.msra.mxu0 %v65
    %490 = vmatpush.msra.mxu0 %v61
    %491 = vmatpush.msra.mxu0 %v57
    %492 = vmatpush.msra.mxu0 %v53
    %493 = vmatpush.msra.mxu0 %v49
    %494 = vmatpush.msra.mxu0 %v45
    %495 = vmatmul.f32.gmra.mxu0 %v365
    %v496 = vpop.f32.mrf.mxu0
    %v497 = vadd.f32 %v372, %v496
    %498 = vdwg.mxu0
    %499 = vmatpush.msra.mxu0 %v169
    %500 = vmatpush.msra.mxu0 %v165
    %501 = vmatpush.msra.mxu0 %v161
    %502 = vmatpush.msra.mxu0 %v157
    %503 = vmatpush.msra.mxu0 %v153
    %504 = vmatpush.msra.mxu0 %v149
    %505 = vmatpush.msra.mxu0 %v145
    %506 = vmatpush.msra.mxu0 %v141
    %507 = vmatpush.msra.mxu0 %v137
    %508 = vmatpush.msra.mxu0 %v133
    %509 = vmatpush.msra.mxu0 %v129
    %510 = vmatpush.msra.mxu0 %v125
    %511 = vmatpush.msra.mxu0 %v121
    %512 = vmatpush.msra.mxu0 %v117
    %513 = vmatpush.msra.mxu0 %v113
    %514 = vmatpush.msra.mxu0 %v109
    %515 = vmatmul.f32.gmra.mxu0 %v366
    %v516 = vpop.f32.mrf.mxu0
    %v517 = vadd.f32 %v497, %v516
    %518 = vdwg.mxu0
    %519 = vmatpush.msra.mxu0 %v233
    %520 = vmatpush.msra.mxu0 %v229
    %521 = vmatpush.msra.mxu0 %v225
    %522 = vmatpush.msra.mxu0 %v221
    %523 = vmatpush.msra.mxu0 %v217
    %524 = vmatpush.msra.mxu0 %v213
    %525 = vmatpush.msra.mxu0 %v209
    %526 = vmatpush.msra.mxu0 %v205
    %527 = vmatpush.msra.mxu0 %v201
    %528 = vmatpush.msra.mxu0 %v197
    %529 = vmatpush.msra.mxu0 %v193
    %530 = vmatpush.msra.mxu0 %v189
    %531 = vmatpush.msra.mxu0 %v185
    %532 = vmatpush.msra.mxu0 %v181
    %533 = vmatpush.msra.mxu0 %v177
    %534 = vmatpush.msra.mxu0 %v173
    %535 = vmatmul.f32.gmra.mxu0 %v367
    %v536 = vpop.f32.mrf.mxu0
    %v537 = vadd.f32 %v517, %v536
    %538 = vdwg.mxu0
    %539 = vmatpush.msra.mxu0 %v297
    %540 = vmatpush.msra.mxu0 %v293
    %541 = vmatpush.msra.mxu0 %v289
    %542 = vmatpush.msra.mxu0 %v285
    %543 = vmatpush.msra.mxu0 %v281
    %544 = vmatpush.msra.mxu0 %v277
    %545 = vmatpush.msra.mxu0 %v273
    %546 = vmatpush.msra.mxu0 %v269
    %547 = vmatpush.msra.mxu0 %v265
    %548 = vmatpush.msra.mxu0 %v261
    %549 = vmatpush.msra.mxu0 %v257
    %550 = vmatpush.msra.mxu0 %v253
    %551 = vmatpush.msra.mxu0 %v249
    %552 = vmatpush.msra.mxu0 %v245
    %553 = vmatpush.msra.mxu0 %v241
    %554 = vmatpush.msra.mxu0 %v237
    %555 = vmatmul.f32.gmra.mxu0 %v368
    %v556 = vpop.f32.mrf.mxu0
    %v557 = vadd.f32 %v537, %v556
    %558 = vdwg.mxu0
    %559 = vmatpush.msra.mxu0 %v361
    %560 = vmatpush.msra.mxu0 %v357
    %561 = vmatpush.msra.mxu0 %v353
    %562 = vmatpush.msra.mxu0 %v349
    %563 = vmatpush.msra.mxu0 %v345
    %564 = vmatpush.msra.mxu0 %v341
    %565 = vmatpush.msra.mxu0 %v337
    %566 = vmatpush.msra.mxu0 %v333
    %567 = vmatpush.msra.mxu0 %v329
    %568 = vmatpush.msra.mxu0 %v325
    %569 = vmatpush.msra.mxu0 %v321
    %570 = vmatpush.msra.mxu0 %v317
    %571 = vmatpush.msra.mxu0 %v313
    %572 = vmatpush.msra.mxu0 %v309
    %573 = vmatpush.msra.mxu0 %v305
    %574 = vmatpush.msra.mxu0 %v301
    %575 = vmatmul.f32.gmra.mxu0 %v369
    %v576 = vpop.f32.mrf.mxu0
    %v577 = vadd.f32 %v557, %v576
    %578 = vdwg.mxu0
    %579 = vmatpush.msra.mxu0 %v106
    %580 = vmatpush.msra.mxu0 %v102
    %581 = vmatpush.msra.mxu0 %v98
    %582 = vmatpush.msra.mxu0 %v94
    %583 = vmatpush.msra.mxu0 %v90
    %584 = vmatpush.msra.mxu0 %v86
    %585 = vmatpush.msra.mxu0 %v82
    %586 = vmatpush.msra.mxu0 %v78
    %587 = vmatpush.msra.mxu0 %v74
    %588 = vmatpush.msra.mxu0 %v70
    %589 = vmatpush.msra.mxu0 %v66
    %590 = vmatpush.msra.mxu0 %v62
    %591 = vmatpush.msra.mxu0 %v58
    %592 = vmatpush.msra.mxu0 %v54
    %593 = vmatpush.msra.mxu0 %v50
    %594 = vmatpush.msra.mxu0 %v46
    %595 = vmatmul.f32.gmra.mxu0 %v365
    %v596 = vpop.f32.mrf.mxu0
    %v597 = vadd.f32 %v373, %v596
    %598 = vdwg.mxu0
    %599 = vmatpush.msra.mxu0 %v170
    %600 = vmatpush.msra.mxu0 %v166
    %601 = vmatpush.msra.mxu0 %v162
    %602 = vmatpush.msra.mxu0 %v158
    %603 = vmatpush.msra.mxu0 %v154
    %604 = vmatpush.msra.mxu0 %v150
    %605 = vmatpush.msra.mxu0 %v146
    %606 = vmatpush.msra.mxu0 %v142
    %607 = vmatpush.msra.mxu0 %v138
    %608 = vmatpush.msra.mxu0 %v134
    %609 = vmatpush.msra.mxu0 %v130
    %610 = vmatpush.msra.mxu0 %v126
    %611 = vmatpush.msra.mxu0 %v122
    %612 = vmatpush.msra.mxu0 %v118
    %613 = vmatpush.msra.mxu0 %v114
    %614 = vmatpush.msra.mxu0 %v110
    %615 = vmatmul.f32.gmra.mxu0 %v366
    %v616 = vpop.f32.mrf.mxu0
    %v617 = vadd.f32 %v597, %v616
    %618 = vdwg.mxu0
    %619 = vmatpush.msra.mxu0 %v234
    %620 = vmatpush.msra.mxu0 %v230
    %621 = vmatpush.msra.mxu0 %v226
    %622 = vmatpush.msra.mxu0 %v222
    %623 = vmatpush.msra.mxu0 %v218
    %624 = vmatpush.msra.mxu0 %v214
    %625 = vmatpush.msra.mxu0 %v210
    %626 = vmatpush.msra.mxu0 %v206
    %627 = vmatpush.msra.mxu0 %v202
    %628 = vmatpush.msra.mxu0 %v198
    %629 = vmatpush.msra.mxu0 %v194
    %630 = vmatpush.msra.mxu0 %v190
    %631 = vmatpush.msra.mxu0 %v186
    %632 = vmatpush.msra.mxu0 %v182
    %633 = vmatpush.msra.mxu0 %v178
    %634 = vmatpush.msra.mxu0 %v174
    %635 = vmatmul.f32.gmra.mxu0 %v367
    %v636 = vpop.f32.mrf.mxu0
    %v637 = vadd.f32 %v617, %v636
    %638 = vdwg.mxu0
    %639 = vmatpush.msra.mxu0 %v298
    %640 = vmatpush.msra.mxu0 %v294
    %641 = vmatpush.msra.mxu0 %v290
    %642 = vmatpush.msra.mxu0 %v286
    %643 = vmatpush.msra.mxu0 %v282
    %644 = vmatpush.msra.mxu0 %v278
    %645 = vmatpush.msra.mxu0 %v274
    %646 = vmatpush.msra.mxu0 %v270
    %647 = vmatpush.msra.mxu0 %v266
    %648 = vmatpush.msra.mxu0 %v262
    %649 = vmatpush.msra.mxu0 %v258
    %650 = vmatpush.msra.mxu0 %v254
    %651 = vmatpush.msra.mxu0 %v250
    %652 = vmatpush.msra.mxu0 %v246
    %653 = vmatpush.msra.mxu0 %v242
    %654 = vmatpush.msra.mxu0 %v238
    %655 = vmatmul.f32.gmra.mxu0 %v368
    %v656 = vpop.f32.mrf.mxu0
    %v657 = vadd.f32 %v637, %v656
    %658 = vdwg.mxu0
    %659 = vmatpush.msra.mxu0 %v362
    %660 = vmatpush.msra.mxu0 %v358
    %661 = vmatpush.msra.mxu0 %v354
    %662 = vmatpush.msra.mxu0 %v350
    %663 = vmatpush.msra.mxu0 %v346
    %664 = vmatpush.msra.mxu0 %v342
    %665 = vmatpush.msra.mxu0 %v338
    %666 = vmatpush.msra.mxu0 %v334
    %667 = vmatpush.msra.mxu0 %v330
    %668 = vmatpush.msra.mxu0 %v326
    %669 = vmatpush.msra.mxu0 %v322
    %670 = vmatpush.msra.mxu0 %v318
    %671 = vmatpush.msra.mxu0 %v314
    %672 = vmatpush.msra.mxu0 %v310
    %673 = vmatpush.msra.mxu0 %v306
    %674 = vmatpush.msra.mxu0 %v302
    %675 = vmatmul.f32.gmra.mxu0 %v369
    %v676 = vpop.f32.mrf.mxu0
    %v677 = vadd.f32 %v657, %v676
    %678 = vdwg.mxu0
    %679 = vmatpush.msra.mxu0 %v107
    %680 = vmatpush.msra.mxu0 %v103
    %681 = vmatpush.msra.mxu0 %v99
    %682 = vmatpush.msra.mxu0 %v95
    %683 = vmatpush.msra.mxu0 %v91
    %684 = vmatpush.msra.mxu0 %v87
    %685 = vmatpush.msra.mxu0 %v83
    %686 = vmatpush.msra.mxu0 %v79
    %687 = vmatpush.msra.mxu0 %v75
    %688 = vmatpush.msra.mxu0 %v71
    %689 = vmatpush.msra.mxu0 %v67
    %690 = vmatpush.msra.mxu0 %v63
    %691 = vmatpush.msra.mxu0 %v59
    %692 = vmatpush.msra.mxu0 %v55
    %693 = vmatpush.msra.mxu0 %v51
    %694 = vmatpush.msra.mxu0 %v47
    %695 = vmatmul.f32.gmra.mxu0 %v365
    %v696 = vpop.f32.mrf.mxu0
    %v697 = vadd.f32 %v374, %v696
    %698 = vdwg.mxu0
    %699 = vmatpush.msra.mxu0 %v171
    %700 = vmatpush.msra.mxu0 %v167
    %701 = vmatpush.msra.mxu0 %v163
    %702 = vmatpush.msra.mxu0 %v159
    %703 = vmatpush.msra.mxu0 %v155
    %704 = vmatpush.msra.mxu0 %v151
    %705 = vmatpush.msra.mxu0 %v147
    %706 = vmatpush.msra.mxu0 %v143
    %707 = vmatpush.msra.mxu0 %v139
    %708 = vmatpush.msra.mxu0 %v135
    %709 = vmatpush.msra.mxu0 %v131
    %710 = vmatpush.msra.mxu0 %v127
    %711 = vmatpush.msra.mxu0 %v123
    %712 = vmatpush.msra.mxu0 %v119
    %713 = vmatpush.msra.mxu0 %v115
    %714 = vmatpush.msra.mxu0 %v111
    %715 = vmatmul.f32.gmra.mxu0 %v366
    %v716 = vpop.f32.mrf.mxu0
    %v717 = vadd.f32 %v697, %v716
    %718 = vdwg.mxu0
    %719 = vmatpush.msra.mxu0 %v235
    %720 = vmatpush.msra.mxu0 %v231
    %721 = vmatpush.msra.mxu0 %v227
    %722 = vmatpush.msra.mxu0 %v223
    %723 = vmatpush.msra.mxu0 %v219
    %724 = vmatpush.msra.mxu0 %v215
    %725 = vmatpush.msra.mxu0 %v211
    %726 = vmatpush.msra.mxu0 %v207
    %727 = vmatpush.msra.mxu0 %v203
    %728 = vmatpush.msra.mxu0 %v199
    %729 = vmatpush.msra.mxu0 %v195
    %730 = vmatpush.msra.mxu0 %v191
    %731 = vmatpush.msra.mxu0 %v187
    %732 = vmatpush.msra.mxu0 %v183
    %733 = vmatpush.msra.mxu0 %v179
    %734 = vmatpush.msra.mxu0 %v175
    %735 = vmatmul.f32.gmra.mxu0 %v367
    %v736 = vpop.f32.mrf.mxu0
    %v737 = vadd.f32 %v717, %v736
    %738 = vdwg.mxu0
    %739 = vmatpush.msra.mxu0 %v299
    %740 = vmatpush.msra.mxu0 %v295
    %741 = vmatpush.msra.mxu0 %v291
    %742 = vmatpush.msra.mxu0 %v287
    %743 = vmatpush.msra.mxu0 %v283
    %744 = vmatpush.msra.mxu0 %v279
    %745 = vmatpush.msra.mxu0 %v275
    %746 = vmatpush.msra.mxu0 %v271
    %747 = vmatpush.msra.mxu0 %v267
    %748 = vmatpush.msra.mxu0 %v263
    %749 = vmatpush.msra.mxu0 %v259
    %750 = vmatpush.msra.mxu0 %v255
    %751 = vmatpush.msra.mxu0 %v251
    %752 = vmatpush.msra.mxu0 %v247
    %753 = vmatpush.msra.mxu0 %v243
    %754 = vmatpush.msra.mxu0 %v239
    %755 = vmatmul.f32.gmra.mxu0 %v368
    %v756 = vpop.f32.mrf.mxu0
    %v757 = vadd.f32 %v737, %v756
    %758 = vdwg.mxu0
    %759 = vmatpush.msra.mxu0 %v363
    %760 = vmatpush.msra.mxu0 %v359
    %761 = vmatpush.msra.mxu0 %v355
    %762 = vmatpush.msra.mxu0 %v351
    %763 = vmatpush.msra.mxu0 %v347
    %764 = vmatpush.msra.mxu0 %v343
    %765 = vmatpush.msra.mxu0 %v339
    %766 = vmatpush.msra.mxu0 %v335
    %767 = vmatpush.msra.mxu0 %v331
    %768 = vmatpush.msra.mxu0 %v327
    %769 = vmatpush.msra.mxu0 %v323
    %770 = vmatpush.msra.mxu0 %v319
    %771 = vmatpush.msra.mxu0 %v315
    %772 = vmatpush.msra.mxu0 %v311
    %773 = vmatpush.msra.mxu0 %v307
    %774 = vmatpush.msra.mxu0 %v303
    %775 = vmatmul.f32.gmra.mxu0 %v369
    %v776 = vpop.f32.mrf.mxu0
    %v777 = vadd.f32 %v757, %v776
    %778 = vdwg.mxu0
    %v779 = vmax.f32 %v477, 0.0
    %v780 = vmax.f32 %v577, 0.0
    %v781 = vmax.f32 %v677, 0.0
    %v782 = vmax.f32 %v777, 0.0
    %v787 = vrot.slane %v780, 4
    %v788 = vrot.slane %v782, 4
    %vm789 = vcmask 1043456
    %v790 = vsel %vm789, %v779, %v787
    %v791 = vsel %vm789, %v781, %v788
    %794 = vst [vmem:[%s3] sm:$0xff] %v790
    %795 = vst [vmem:[%s3 + $0x8] sm:$0xff] %v791
    %s796 = scalar_lea.vmem %s0, 8
    %v797 = vld [vmem:[%s796] sm:$0xf]
    %v798 = vld [vmem:[%s796 + $0x1] sm:$0xf]
    %v799 = vld [vmem:[%s796 + $0x2] sm:$0xf]
    %v800 = vld [vmem:[%s796 + $0x3] sm:$0xf]
    %v801 = vld [vmem:[%s796 + $0x4] sm:$0xf]
    %802 = vmatpush.msra.mxu0 %v104
    %803 = vmatpush.msra.mxu0 %v100
    %804 = vmatpush.msra.mxu0 %v96
    %805 = vmatpush.msra.mxu0 %v92
    %806 = vmatpush.msra.mxu0 %v88
    %807 = vmatpush.msra.mxu0 %v84
    %808 = vmatpush.msra.mxu0 %v80
    %809 = vmatpush.msra.mxu0 %v76
    %810 = vmatpush.msra.mxu0 %v72
    %811 = vmatpush.msra.mxu0 %v68
    %812 = vmatpush.msra.mxu0 %v64
    %813 = vmatpush.msra.mxu0 %v60
    %814 = vmatpush.msra.mxu0 %v56
    %815 = vmatpush.msra.mxu0 %v52
    %816 = vmatpush.msra.mxu0 %v48
    %817 = vmatpush.msra.mxu0 %v44
    %818 = vmatmul.f32.gmra.mxu0 %v797
    %v819 = vpop.f32.mrf.mxu0
    %v820 = vadd.f32 %v371, %v819
    %821 = vdwg.mxu0
    %822 = vmatpush.msra.mxu0 %v168
    %823 = vmatpush.msra.mxu0 %v164
    %824 = vmatpush.msra.mxu0 %v160
    %825 = vmatpush.msra.mxu0 %v156
    %826 = vmatpush.msra.mxu0 %v152
    %827 = vmatpush.msra.mxu0 %v148
    %828 = vmatpush.msra.mxu0 %v144
    %829 = vmatpush.msra.mxu0 %v140
    %830 = vmatpush.msra.mxu0 %v136
    %831 = vmatpush.msra.mxu0 %v132
    %832 = vmatpush.msra.mxu0 %v128
    %833 = vmatpush.msra.mxu0 %v124
    %834 = vmatpush.msra.mxu0 %v120
    %835 = vmatpush.msra.mxu0 %v116
    %836 = vmatpush.msra.mxu0 %v112
    %837 = vmatpush.msra.mxu0 %v108
    %838 = vmatmul.f32.gmra.mxu0 %v798
    %v839 = vpop.f32.mrf.mxu0
    %v840 = vadd.f32 %v820, %v839
    %841 = vdwg.mxu0
    %842 = vmatpush.msra.mxu0 %v232
    %843 = vmatpush.msra.mxu0 %v228
    %844 = vmatpush.msra.mxu0 %v224
    %845 = vmatpush.msra.mxu0 %v220
    %846 = vmatpush.msra.mxu0 %v216
    %847 = vmatpush.msra.mxu0 %v212
    %848 = vmatpush.msra.mxu0 %v208
    %849 = vmatpush.msra.mxu0 %v204
    %850 = vmatpush.msra.mxu0 %v200
    %851 = vmatpush.msra.mxu0 %v196
    %852 = vmatpush.msra.mxu0 %v192
    %853 = vmatpush.msra.mxu0 %v188
    %854 = vmatpush.msra.mxu0 %v184
    %855 = vmatpush.msra.mxu0 %v180
    %856 = vmatpush.msra.mxu0 %v176
    %857 = vmatpush.msra.mxu0 %v172
    %858 = vmatmul.f32.gmra.mxu0 %v799
    %v859 = vpop.f32.mrf.mxu0
    %v860 = vadd.f32 %v840, %v859
    %861 = vdwg.mxu0
    %862 = vmatpush.msra.mxu0 %v296
    %863 = vmatpush.msra.mxu0 %v292
    %864 = vmatpush.msra.mxu0 %v288
    %865 = vmatpush.msra.mxu0 %v284
    %866 = vmatpush.msra.mxu0 %v280
    %867 = vmatpush.msra.mxu0 %v276
    %868 = vmatpush.msra.mxu0 %v272
    %869 = vmatpush.msra.mxu0 %v268
    %870 = vmatpush.msra.mxu0 %v264
    %871 = vmatpush.msra.mxu0 %v260
    %872 = vmatpush.msra.mxu0 %v256
    %873 = vmatpush.msra.mxu0 %v252
    %874 = vmatpush.msra.mxu0 %v248
    %875 = vmatpush.msra.mxu0 %v244
    %876 = vmatpush.msra.mxu0 %v240
    %877 = vmatpush.msra.mxu0 %v236
    %878 = vmatmul.f32.gmra.mxu0 %v800
    %v879 = vpop.f32.mrf.mxu0
    %v880 = vadd.f32 %v860, %v879
    %881 = vdwg.mxu0
    %882 = vmatpush.msra.mxu0 %v360
    %883 = vmatpush.msra.mxu0 %v356
    %884 = vmatpush.msra.mxu0 %v352
    %885 = vmatpush.msra.mxu0 %v348
    %886 = vmatpush.msra.mxu0 %v344
    %887 = vmatpush.msra.mxu0 %v340
    %888 = vmatpush.msra.mxu0 %v336
    %889 = vmatpush.msra.mxu0 %v332
    %890 = vmatpush.msra.mxu0 %v328
    %891 = vmatpush.msra.mxu0 %v324
    %892 = vmatpush.msra.mxu0 %v320
    %893 = vmatpush.msra.mxu0 %v316
    %894 = vmatpush.msra.mxu0 %v312
    %895 = vmatpush.msra.mxu0 %v308
    %896 = vmatpush.msra.mxu0 %v304
    %897 = vmatpush.msra.mxu0 %v300
    %898 = vmatmul.f32.gmra.mxu0 %v801
    %v899 = vpop.f32.mrf.mxu0
    %v900 = vadd.f32 %v880, %v899
    %901 = vdwg.mxu0
    %902 = vmatpush.msra.mxu0 %v105
    %903 = vmatpush.msra.mxu0 %v101
    %904 = vmatpush.msra.mxu0 %v97
    %905 = vmatpush.msra.mxu0 %v93
    %906 = vmatpush.msra.mxu0 %v89
    %907 = vmatpush.msra.mxu0 %v85
    %908 = vmatpush.msra.mxu0 %v81
    %909 = vmatpush.msra.mxu0 %v77
    %910 = vmatpush.msra.mxu0 %v73
    %911 = vmatpush.msra.mxu0 %v69
    %912 = vmatpush.msra.mxu0 %v65
    %913 = vmatpush.msra.mxu0 %v61
    %914 = vmatpush.msra.mxu0 %v57
    %915 = vmatpush.msra.mxu0 %v53
    %916 = vmatpush.msra.mxu0 %v49
    %917 = vmatpush.msra.mxu0 %v45
    %918 = vmatmul.f32.gmra.mxu0 %v797
    %v919 = vpop.f32.mrf.mxu0
    %v920 = vadd.f32 %v372, %v919
    %921 = vdwg.mxu0
    %922 = vmatpush.msra.mxu0 %v169
    %923 = vmatpush.msra.mxu0 %v165
    %924 = vmatpush.msra.mxu0 %v161
    %925 = vmatpush.msra.mxu0 %v157
    %926 = vmatpush.msra.mxu0 %v153
    %927 = vmatpush.msra.mxu0 %v149
    %928 = vmatpush.msra.mxu0 %v145
    %929 = vmatpush.msra.mxu0 %v141
    %930 = vmatpush.msra.mxu0 %v137
    %931 = vmatpush.msra.mxu0 %v133
    %932 = vmatpush.msra.mxu0 %v129
    %933 = vmatpush.msra.mxu0 %v125
    %934 = vmatpush.msra.mxu0 %v121
    %935 = vmatpush.msra.mxu0 %v117
    %936 = vmatpush.msra.mxu0 %v113
    %937 = vmatpush.msra.mxu0 %v109
    %938 = vmatmul.f32.gmra.mxu0 %v798
    %v939 = vpop.f32.mrf.mxu0
    %v940 = vadd.f32 %v920, %v939
    %941 = vdwg.mxu0
    %942 = vmatpush.msra.mxu0 %v233
    %943 = vmatpush.msra.mxu0 %v229
    %944 = vmatpush.msra.mxu0 %v225
    %945 = vmatpush.msra.mxu0 %v221
    %946 = vmatpush.msra.mxu0 %v217
    %947 = vmatpush.msra.mxu0 %v213
    %948 = vmatpush.msra.mxu0 %v209
    %949 = vmatpush.msra.mxu0 %v205
    %950 = vmatpush.msra.mxu0 %v201
    %951 = vmatpush.msra.mxu0 %v197
    %952 = vmatpush.msra.mxu0 %v193
    %953 = vmatpush.msra.mxu0 %v189
    %954 = vmatpush.msra.mxu0 %v185
    %955 = vmatpush.msra.mxu0 %v181
    %956 = vmatpush.msra.mxu0 %v177
    %957 = vmatpush.msra.mxu0 %v173
    %958 = vmatmul.f32.gmra.mxu0 %v799
    %v959 = vpop.f32.mrf.mxu0
    %v960 = vadd.f32 %v940, %v959
    %961 = vdwg.mxu0
    %962 = vmatpush.msra.mxu0 %v297
    %963 = vmatpush.msra.mxu0 %v293
    %964 = vmatpush.msra.mxu0 %v289
    %965 = vmatpush.msra.mxu0 %v285
    %966 = vmatpush.msra.mxu0 %v281
    %967 = vmatpush.msra.mxu0 %v277
    %968 = vmatpush.msra.mxu0 %v273
    %969 = vmatpush.msra.mxu0 %v269
    %970 = vmatpush.msra.mxu0 %v265
    %971 = vmatpush.msra.mxu0 %v261
    %972 = vmatpush.msra.mxu0 %v257
    %973 = vmatpush.msra.mxu0 %v253
    %974 = vmatpush.msra.mxu0 %v249
    %975 = vmatpush.msra.mxu0 %v245
    %976 = vmatpush.msra.mxu0 %v241
    %977 = vmatpush.msra.mxu0 %v237
    %978 = vmatmul.f32.gmra.mxu0 %v800
    %v979 = vpop.f32.mrf.mxu0
    %v980 = vadd.f32 %v960, %v979
    %981 = vdwg.mxu0
    %982 = vmatpush.msra.mxu0 %v361
    %983 = vmatpush.msra.mxu0 %v357
    %984 = vmatpush.msra.mxu0 %v353
    %985 = vmatpush.msra.mxu0 %v349
    %986 = vmatpush.msra.mxu0 %v345
    %987 = vmatpush.msra.mxu0 %v341
    %988 = vmatpush.msra.mxu0 %v337
    %989 = vmatpush.msra.mxu0 %v333
    %990 = vmatpush.msra.mxu0 %v329
    %991 = vmatpush.msra.mxu0 %v325
    %992 = vmatpush.msra.mxu0 %v321
    %993 = vmatpush.msra.mxu0 %v317
    %994 = vmatpush.msra.mxu0 %v313
    %995 = vmatpush.msra.mxu0 %v309
    %996 = vmatpush.msra.mxu0 %v305
    %997 = vmatpush.msra.mxu0 %v301
    %998 = vmatmul.f32.gmra.mxu0 %v801
    %v999 = vpop.f32.mrf.mxu0
    %v1000 = vadd.f32 %v980, %v999
    %1001 = vdwg.mxu0
    %1002 = vmatpush.msra.mxu0 %v106
    %1003 = vmatpush.msra.mxu0 %v102
    %1004 = vmatpush.msra.mxu0 %v98
    %1005 = vmatpush.msra.mxu0 %v94
    %1006 = vmatpush.msra.mxu0 %v90
    %1007 = vmatpush.msra.mxu0 %v86
    %1008 = vmatpush.msra.mxu0 %v82
    %1009 = vmatpush.msra.mxu0 %v78
    %1010 = vmatpush.msra.mxu0 %v74
    %1011 = vmatpush.msra.mxu0 %v70
    %1012 = vmatpush.msra.mxu0 %v66
    %1013 = vmatpush.msra.mxu0 %v62
    %1014 = vmatpush.msra.mxu0 %v58
    %1015 = vmatpush.msra.mxu0 %v54
    %1016 = vmatpush.msra.mxu0 %v50
    %1017 = vmatpush.msra.mxu0 %v46
    %1018 = vmatmul.f32.gmra.mxu0 %v797
    %v1019 = vpop.f32.mrf.mxu0
    %v1020 = vadd.f32 %v373, %v1019
    %1021 = vdwg.mxu0
    %1022 = vmatpush.msra.mxu0 %v170
    %1023 = vmatpush.msra.mxu0 %v166
    %1024 = vmatpush.msra.mxu0 %v162
    %1025 = vmatpush.msra.mxu0 %v158
    %1026 = vmatpush.msra.mxu0 %v154
    %1027 = vmatpush.msra.mxu0 %v150
    %1028 = vmatpush.msra.mxu0 %v146
    %1029 = vmatpush.msra.mxu0 %v142
    %1030 = vmatpush.msra.mxu0 %v138
    %1031 = vmatpush.msra.mxu0 %v134
    %1032 = vmatpush.msra.mxu0 %v130
    %1033 = vmatpush.msra.mxu0 %v126
    %1034 = vmatpush.msra.mxu0 %v122
    %1035 = vmatpush.msra.mxu0 %v118
    %1036 = vmatpush.msra.mxu0 %v114
    %1037 = vmatpush.msra.mxu0 %v110
    %1038 = vmatmul.f32.gmra.mxu0 %v798
    %v1039 = vpop.f32.mrf.mxu0
    %v1040 = vadd.f32 %v1020, %v1039
    %1041 = vdwg.mxu0
    %1042 = vmatpush.msra.mxu0 %v234
    %1043 = vmatpush.msra.mxu0 %v230
    %1044 = vmatpush.msra.mxu0 %v226
    %1045 = vmatpush.msra.mxu0 %v222
    %1046 = vmatpush.msra.mxu0 %v218
    %1047 = vmatpush.msra.mxu0 %v214
    %1048 = vmatpush.msra.mxu0 %v210
    %1049 = vmatpush.msra.mxu0 %v206
    %1050 = vmatpush.msra.mxu0 %v202
    %1051 = vmatpush.msra.mxu0 %v198
    %1052 = vmatpush.msra.mxu0 %v194
    %1053 = vmatpush.msra.mxu0 %v190
    %1054 = vmatpush.msra.mxu0 %v186
    %1055 = vmatpush.msra.mxu0 %v182
    %1056 = vmatpush.msra.mxu0 %v178
    %1057 = vmatpush.msra.mxu0 %v174
    %1058 = vmatmul.f32.gmra.mxu0 %v799
    %v1059 = vpop.f32.mrf.mxu0
    %v1060 = vadd.f32 %v1040, %v1059
    %1061 = vdwg.mxu0
    %1062 = vmatpush.msra.mxu0 %v298
    %1063 = vmatpush.msra.mxu0 %v294
    %1064 = vmatpush.msra.mxu0 %v290
    %1065 = vmatpush.msra.mxu0 %v286
    %1066 = vmatpush.msra.mxu0 %v282
    %1067 = vmatpush.msra.mxu0 %v278
    %1068 = vmatpush.msra.mxu0 %v274
    %1069 = vmatpush.msra.mxu0 %v270
    %1070 = vmatpush.msra.mxu0 %v266
    %1071 = vmatpush.msra.mxu0 %v262
    %1072 = vmatpush.msra.mxu0 %v258
    %1073 = vmatpush.msra.mxu0 %v254
    %1074 = vmatpush.msra.mxu0 %v250
    %1075 = vmatpush.msra.mxu0 %v246
    %1076 = vmatpush.msra.mxu0 %v242
    %1077 = vmatpush.msra.mxu0 %v238
    %1078 = vmatmul.f32.gmra.mxu0 %v800
    %v1079 = vpop.f32.mrf.mxu0
    %v1080 = vadd.f32 %v1060, %v1079
    %1081 = vdwg.mxu0
    %1082 = vmatpush.msra.mxu0 %v362
    %1083 = vmatpush.msra.mxu0 %v358
    %1084 = vmatpush.msra.mxu0 %v354
    %1085 = vmatpush.msra.mxu0 %v350
    %1086 = vmatpush.msra.mxu0 %v346
    %1087 = vmatpush.msra.mxu0 %v342
    %1088 = vmatpush.msra.mxu0 %v338
    %1089 = vmatpush.msra.mxu0 %v334
    %1090 = vmatpush.msra.mxu0 %v330
    %1091 = vmatpush.msra.mxu0 %v326
    %1092 = vmatpush.msra.mxu0 %v322
    %1093 = vmatpush.msra.mxu0 %v318
    %1094 = vmatpush.msra.mxu0 %v314
    %1095 = vmatpush.msra.mxu0 %v310
    %1096 = vmatpush.msra.mxu0 %v306
    %1097 = vmatpush.msra.mxu0 %v302
    %1098 = vmatmul.f32.gmra.mxu0 %v801
    %v1099 = vpop.f32.mrf.mxu0
    %v1100 = vadd.f32 %v1080, %v1099
    %1101 = vdwg.mxu0
    %1102 = vmatpush.msra.mxu0 %v107
    %1103 = vmatpush.msra.mxu0 %v103
    %1104 = vmatpush.msra.mxu0 %v99
    %1105 = vmatpush.msra.mxu0 %v95
    %1106 = vmatpush.msra.mxu0 %v91
    %1107 = vmatpush.msra.mxu0 %v87
    %1108 = vmatpush.msra.mxu0 %v83
    %1109 = vmatpush.msra.mxu0 %v79
    %1110 = vmatpush.msra.mxu0 %v75
    %1111 = vmatpush.msra.mxu0 %v71
    %1112 = vmatpush.msra.mxu0 %v67
    %1113 = vmatpush.msra.mxu0 %v63
    %1114 = vmatpush.msra.mxu0 %v59
    %1115 = vmatpush.msra.mxu0 %v55
    %1116 = vmatpush.msra.mxu0 %v51
    %1117 = vmatpush.msra.mxu0 %v47
    %1118 = vmatmul.f32.gmra.mxu0 %v797
    %v1119 = vpop.f32.mrf.mxu0
    %v1120 = vadd.f32 %v374, %v1119
    %1121 = vdwg.mxu0
    %1122 = vmatpush.msra.mxu0 %v171
    %1123 = vmatpush.msra.mxu0 %v167
    %1124 = vmatpush.msra.mxu0 %v163
    %1125 = vmatpush.msra.mxu0 %v159
    %1126 = vmatpush.msra.mxu0 %v155
    %1127 = vmatpush.msra.mxu0 %v151
    %1128 = vmatpush.msra.mxu0 %v147
    %1129 = vmatpush.msra.mxu0 %v143
    %1130 = vmatpush.msra.mxu0 %v139
    %1131 = vmatpush.msra.mxu0 %v135
    %1132 = vmatpush.msra.mxu0 %v131
    %1133 = vmatpush.msra.mxu0 %v127
    %1134 = vmatpush.msra.mxu0 %v123
    %1135 = vmatpush.msra.mxu0 %v119
    %1136 = vmatpush.msra.mxu0 %v115
    %1137 = vmatpush.msra.mxu0 %v111
    %1138 = vmatmul.f32.gmra.mxu0 %v798
    %v1139 = vpop.f32.mrf.mxu0
    %v1140 = vadd.f32 %v1120, %v1139
    %1141 = vdwg.mxu0
    %1142 = vmatpush.msra.mxu0 %v235
    %1143 = vmatpush.msra.mxu0 %v231
    %1144 = vmatpush.msra.mxu0 %v227
    %1145 = vmatpush.msra.mxu0 %v223
    %1146 = vmatpush.msra.mxu0 %v219
    %1147 = vmatpush.msra.mxu0 %v215
    %1148 = vmatpush.msra.mxu0 %v211
    %1149 = vmatpush.msra.mxu0 %v207
    %1150 = vmatpush.msra.mxu0 %v203
    %1151 = vmatpush.msra.mxu0 %v199
    %1152 = vmatpush.msra.mxu0 %v195
    %1153 = vmatpush.msra.mxu0 %v191
    %1154 = vmatpush.msra.mxu0 %v187
    %1155 = vmatpush.msra.mxu0 %v183
    %1156 = vmatpush.msra.mxu0 %v179
    %1157 = vmatpush.msra.mxu0 %v175
    %1158 = vmatmul.f32.gmra.mxu0 %v799
    %v1159 = vpop.f32.mrf.mxu0
    %v1160 = vadd.f32 %v1140, %v1159
    %1161 = vdwg.mxu0
    %1162 = vmatpush.msra.mxu0 %v299
    %1163 = vmatpush.msra.mxu0 %v295
    %1164 = vmatpush.msra.mxu0 %v291
    %1165 = vmatpush.msra.mxu0 %v287
    %1166 = vmatpush.msra.mxu0 %v283
    %1167 = vmatpush.msra.mxu0 %v279
    %1168 = vmatpush.msra.mxu0 %v275
    %1169 = vmatpush.msra.mxu0 %v271
    %1170 = vmatpush.msra.mxu0 %v267
    %1171 = vmatpush.msra.mxu0 %v263
    %1172 = vmatpush.msra.mxu0 %v259
    %1173 = vmatpush.msra.mxu0 %v255
    %1174 = vmatpush.msra.mxu0 %v251
    %1175 = vmatpush.msra.mxu0 %v247
    %1176 = vmatpush.msra.mxu0 %v243
    %1177 = vmatpush.msra.mxu0 %v239
    %1178 = vmatmul.f32.gmra.mxu0 %v800
    %v1179 = vpop.f32.mrf.mxu0
    %v1180 = vadd.f32 %v1160, %v1179
    %1181 = vdwg.mxu0
    %1182 = vmatpush.msra.mxu0 %v363
    %1183 = vmatpush.msra.mxu0 %v359
    %1184 = vmatpush.msra.mxu0 %v355
    %1185 = vmatpush.msra.mxu0 %v351
    %1186 = vmatpush.msra.mxu0 %v347
    %1187 = vmatpush.msra.mxu0 %v343
    %1188 = vmatpush.msra.mxu0 %v339
    %1189 = vmatpush.msra.mxu0 %v335
    %1190 = vmatpush.msra.mxu0 %v331
    %1191 = vmatpush.msra.mxu0 %v327
    %1192 = vmatpush.msra.mxu0 %v323
    %1193 = vmatpush.msra.mxu0 %v319
    %1194 = vmatpush.msra.mxu0 %v315
    %1195 = vmatpush.msra.mxu0 %v311
    %1196 = vmatpush.msra.mxu0 %v307
    %1197 = vmatpush.msra.mxu0 %v303
    %1198 = vmatmul.f32.gmra.mxu0 %v801
    %v1199 = vpop.f32.mrf.mxu0
    %v1200 = vadd.f32 %v1180, %v1199
    %1201 = vdwg.mxu0
    %v1202 = vmax.f32 %v900, 0.0
    %v1203 = vmax.f32 %v1000, 0.0
    %v1204 = vmax.f32 %v1100, 0.0
    %v1205 = vmax.f32 %v1200, 0.0
    %v1210 = vrot.slane %v1203, 4
    %v1211 = vrot.slane %v1205, 4
    %v1212 = vsel %vm789, %v1202, %v1210
    %v1213 = vsel %vm789, %v1204, %v1211
    %s1216 = scalar_lea.vmem %s3, 16
    %1217 = vst [vmem:[%s1216] sm:$0xff] %v1212
    %1218 = vst [vmem:[%s1216 + $0x8] sm:$0xff] %v1213
    // Predicated region
    $region22: #{forward.1} parent=1 // pred_check
      _
    $region23: #{forward.1} parent=1 // pred_check_branch
      %1220 = sbr.rel (0) target = $region25
    $region24: #{forward.1} parent=1 // pred_region
      _
    $region25: #{forward.1} parent=1 // pred_fallthru
      _
    // Predicated region
    $region26: #{forward.1} parent=1 // pred_check
      _
    $region27: #{forward.1} parent=1 // pred_check_branch
      %1222 = sbr.rel (0) target = $region29
    $region28: #{forward.1} parent=1 // pred_region
      _
    $region29: #{forward.1} parent=1 // pred_fallthru
      _
    %1223 = vsyncpa [#allocation3], 1
    %1224 = vsyncpa [#allocation5], 1

</llo_original>
